<compile_context>
chip_gen: v7x
topology: tpu7x:2x2x1
jax: 0.10.0
libtpu: 0.0.40
codegen_flags: <defaults>
</compile_context>

<pallas_src>
import functools

import jax
import jax.numpy as jnp
from jax.experimental import pallas as pl
from jax.experimental.pallas import tpu as pltpu


def _cdiv(a, b):
    return -(-a // b)


def _coord_norm_kernel(x_ref, m_ref, w_ref, o_ref, *, norm, eps, n_sets):
    """One grid step: a (3, G, N) slab = G (batch, set) groups, all N nodes.

    Layout: coordinate component on the leading (untiled) axis, groups on
    sublanes, nodes on lanes -> dense vregs, lane-dense loads/stores, lane
    reductions over nodes, and the component sum is plain VPU adds (no XLU).
    Two-pass structure keeps only ~2 f32 (G, N) temporaries live at peak
    (instead of x + shifted + out), letting the wrapper pick larger tiles.
    """
    m = m_ref[...].astype(jnp.float32)                     # (G, N)  0/1 mask
    w = w_ref[...].astype(jnp.float32)                     # (G, 1)  per-set weight

    # Guard fully-padded groups: PyTorch would produce NaN via 0/0; we emit
    # zeros for those groups instead (documented + tested divergence).
    n_atoms = jnp.sum(m, axis=-1, keepdims=True)           # (G, 1)
    inv_atoms = 1.0 / jnp.maximum(n_atoms, 1.0)            # (G, 1)

    # Pass 1: per-component masked centre of mass + squared vector lengths.
    coms = []
    len_sq = jnp.zeros_like(m)
    for c in range(3):                                     # static, fully unrolled
        xc = x_ref[c].astype(jnp.float32)                  # (G, N)
        com_c = jnp.sum(xc * m, axis=-1, keepdims=True) * inv_atoms
        coms.append(com_c)
        sc = (xc - com_c) * m
        len_sq = len_sq + sc * sc

    if norm == "length":
        lengths = jnp.sqrt(len_sq)                         # (G, N)
        scaled = jnp.sum(lengths, axis=-1, keepdims=True) * inv_atoms
        scale = w / (scaled + eps)                         # (G, 1)
    elif norm == "gvp":
        lengths = jnp.sqrt(len_sq)
        # Exact division (not approx reciprocal): kernel is HBM-bound, so the
        # extra VPU/EUP work is free and numerics match PyTorch f32 closely.
        scale = (w * (float(n_sets) ** 0.5)) / (lengths + eps)   # (G, N)
    else:  # 'none'
        scale = w                                          # (G, 1)

    # Pass 2: re-read each component from VMEM (cheap) instead of keeping all
    # three shifted f32 slabs alive across the reductions.  m in {0,1}, so a
    # single mask multiply covers both mask applications of the module.
    for c in range(3):
        xc = x_ref[c].astype(jnp.float32)
        o_ref[c] = ((xc - coms[c]) * m * scale).astype(o_ref.dtype)


def _sublane_rows(itemsize):
    """Rows packed per vreg: 8 for 4-byte, 16 for 2-byte, 32 for 1-byte dtypes."""
    return 8 * max(1, 4 // max(1, itemsize))


def _per_group_vmem_bytes(n_nodes, coord_itemsize, mask_itemsize):
    """Per-group VMEM footprint: double-buffered pipeline buffers (coords in,
    coords out, mask, weight) plus ~4 f32 (gt, N) in-kernel temporaries."""
    pipeline = 2 * (3 * n_nodes * coord_itemsize       # coords in
                    + 3 * n_nodes * coord_itemsize     # coords out
                    + n_nodes * mask_itemsize          # mask
                    + 4)                               # per-group weight
    temporaries = 4 * n_nodes * 4
    return pipeline + temporaries


def _vmem_capacity_bytes():
    try:
        info = pltpu.get_tpu_info()
        cap = int(getattr(info, "vmem_capacity_bytes", 0) or 0)
        if cap > 0:
            return cap
    except Exception:
        pass
    return 64 * 2 ** 20   # conservative fallback = v7x per-TensorCore VMEM


def _pick_group_tile(n_groups, n_nodes, coord_itemsize, mask_itemsize,
                     vmem_budget_bytes, min_steps=1):
    """Largest dtype-aligned group tile that fits the VMEM budget.

    Single-TC chips (v5e/v6e): take the single biggest fitting tile (min_steps=1).
    v7x with core_parallel: keep >= 2 steps so both TensorCores get work.
    Non-divisor tiles are fine: the caller uses a cdiv grid with a partial
    last block (per-group math is independent, padded groups are discarded).
    """
    per_group = _per_group_vmem_bytes(n_nodes, coord_itemsize, mask_itemsize)
    cap = max(1, int(vmem_budget_bytes) // per_group)
    align = max(_sublane_rows(coord_itemsize), _sublane_rows(mask_itemsize))
    target = min(cap, _cdiv(n_groups, max(1, min_steps)))
    if target >= n_groups:
        return n_groups                      # single block; full-dim escape is legal
    gt = (target // align) * align
    if gt == 0:                              # can't split below one aligned row-group
        gt = n_groups if align >= n_groups else align
    return gt


def coord_norm_packed(coords_cf, node_mask, set_weights, *, norm="length",
                      eps=1e-6, vmem_budget_bytes=None, core_parallel=False):
    """CoordNorm on component-major ("packed") coordinates — no layout transposes.

    Args:
      coords_cf:   [3, B, S, N]  coordinates, component-major layout.
      node_mask:   [B, S, N]     1 for real node, 0 for padding.
      set_weights: per-set learnable scale, any shape broadcastable to [S].
      core_parallel: set True on v7x to shard the group axis across both
        TensorCores (pltpu.CORE_PARALLEL); leave False on single-TC chips.
    Returns:
      [3, B, S, N] normalised coordinates (same dtype as coords_cf).
    """
    norm = "none" if norm is None else norm
    if norm not in ("none", "gvp", "length"):
        raise ValueError(f"Unknown normalisation type '{norm}'")

    _, B, S, N = coords_cf.shape
    dtype = coords_cf.dtype
    coord_itemsize = jnp.dtype(dtype).itemsize

    # Mask travels as bf16 (0/1 exactly representable) and is upcast in-kernel.
    mask_dtype = jnp.bfloat16
    mask_itemsize = 2

    # Lane-dense node axis: pad N to a multiple of 128 (dense vst instead of
    # masked vst.msk); padded nodes carry mask 0 and are sliced off afterwards.
    n_pad = (-N) % 128
    if n_pad:
        coords_cf = jnp.pad(coords_cf, ((0, 0), (0, 0), (0, 0), (0, n_pad)))
        node_mask = jnp.pad(node_mask, ((0, 0), (0, 0), (0, n_pad)))
    Np = N + n_pad

    G = B * S
    x = coords_cf.reshape(3, G, Np)
    m = node_mask.reshape(G, Np).astype(mask_dtype)
    sw = jnp.asarray(set_weights, jnp.float32).reshape(-1)
    w = jnp.broadcast_to(sw.reshape(1, -1), (B, S)).reshape(G, 1)

    # Generation-aware sizing from the chip's actual VMEM capacity
    # (128 MiB v5e/v6e, 64 MiB per TensorCore on v7x).
    vmem_cap = _vmem_capacity_bytes()
    if vmem_budget_bytes is None:
        vmem_budget_bytes = min(64 * 2 ** 20, max(16 * 2 ** 20, int(0.4 * vmem_cap)))

    # A plain 1-D "parallel" grid is NOT core-split on v7x; core_parallel=True
    # uses CORE_PARALLEL semantics and keeps >= 2 grid steps.
    # TODO(synk): auto-detect the TensorCore count from pltpu.get_tpu_info().
    min_steps = 2 if core_parallel else 1

    gt = _pick_group_tile(G, Np, coord_itemsize, mask_itemsize,
                          vmem_budget_bytes, min_steps=min_steps)
    n_steps = _cdiv(G, gt)                     # partial last block allowed
    per_group = _per_group_vmem_bytes(Np, coord_itemsize, mask_itemsize)
    per_step = gt * per_group

    headroom = 16 * 2 ** 20
    vmem_limit = int(min(max(32 * 2 ** 20, per_step + (8 << 20)),
                         max(headroom, vmem_cap - headroom)))
    vmem_limit = int(max(vmem_limit, per_step + (2 << 20)))

    kernel = functools.partial(_coord_norm_kernel, norm=norm, eps=eps, n_sets=S)

    # Deeper input buffering only when the per-step coord slab is well below
    # the ~512 KiB DMA sweet spot and there are enough steps to pipeline.
    coord_spec_kwargs = {}
    if n_steps >= 3 and 3 * gt * Np * coord_itemsize < (256 << 10):
        coord_spec_kwargs["pipeline_mode"] = pl.Buffered(3)

    semantics = (pltpu.CORE_PARALLEL,) if core_parallel else ("parallel",)

    bytes_accessed = (2 * 3 * G * Np * coord_itemsize   # coords in + out
                      + G * Np * mask_itemsize          # mask
                      + G * 4)                          # weights
    cost = pl.CostEstimate(flops=int(24 * G * Np),
                           transcendentals=int(2 * G * Np),
                           bytes_accessed=int(bytes_accessed))

    out = pl.pallas_call(
        kernel,
        out_shape=jax.ShapeDtypeStruct((3, G, Np), dtype),
        grid=(n_steps,),
        in_specs=[
            pl.BlockSpec((3, gt, Np), lambda i: (0, i, 0), **coord_spec_kwargs),
            pl.BlockSpec((gt, Np), lambda i: (i, 0)),
            pl.BlockSpec((gt, 1), lambda i: (i, 0)),
        ],
        out_specs=pl.BlockSpec((3, gt, Np), lambda i: (0, i, 0)),
        compiler_params=pltpu.CompilerParams(
            dimension_semantics=semantics,
            vmem_limit_bytes=vmem_limit),
        cost_estimate=cost,
    )(x, m, w)

    out = out.reshape(3, B, S, Np)
    if n_pad:
        out = out[..., :N]
    return out


def coord_norm(coords, node_mask, set_weights, *, norm="length", eps=1e-6,
               vmem_budget_bytes=None, core_parallel=False):
    """Drop-in wrapper matching the PyTorch [B, S, N, 3] layout.

    NOTE: this pays two XLA transposes (a full extra HBM read+write of the
    coords on each side of the custom call).  Performance-critical callers
    should keep coordinates resident in the packed [3, B, S, N] layout across
    layers and call `coord_norm_packed` directly — that removes ~2/3 of the
    HBM traffic of this path on every TPU generation.
    # TODO(synk): plumb the packed layout through the surrounding model so the
    # boundary transposes disappear entirely.
    """
    packed = jnp.transpose(coords, (3, 0, 1, 2))                     # [3,B,S,N]
    out = coord_norm_packed(packed, node_mask, set_weights, norm=norm, eps=eps,
                            vmem_budget_bytes=vmem_budget_bytes,
                            core_parallel=core_parallel)
    return jnp.transpose(out, (1, 2, 3, 0))                          # [B,S,N,3]


def _coord_norm_ref(coords, node_mask, set_weights, norm, eps, n_sets):
    """Pure-JAX reference mirroring the PyTorch module, with the same
    fully-padded-group guard as the kernel (such groups return zeros; the
    PyTorch module would emit NaN via 0/0)."""
    coords = coords.astype(jnp.float32)
    maskf = node_mask.astype(jnp.float32)
    mask = maskf[..., None]                                       # [B,S,N,1]
    masked = coords * mask
    n_atoms = jnp.maximum(maskf.sum(-1, keepdims=True), 1.0)     # [B,S,1]
    com = masked.sum(-2) / n_atoms                                # [B,S,3]
    shifted = (coords - com[..., None, :]) * mask                 # zero_com + mask
    lengths = jnp.sqrt(jnp.sum(shifted * shifted, axis=-1))       # [B,S,N]
    if norm == "length":
        scaled = lengths.sum(-1, keepdims=True) / n_atoms
        div = scaled[..., None] + eps
    elif norm == "gvp":
        div = (lengths[..., None] + eps) / (float(n_sets) ** 0.5)
    else:
        div = jnp.ones_like(shifted)
    w = jnp.asarray(set_weights, jnp.float32).reshape(1, -1, 1, 1)
    out = shifted * w / div
    return out * mask


if __name__ == "__main__":
    key = jax.random.PRNGKey(0)
    eps = 1e-6

    # ---- Case 1: lane-dense N (multiple of 128), all three norm modes ----
    B, S, N = 2, 4, 128
    coords = jax.random.normal(key, (B, S, N, 3), dtype=jnp.float32)
    node_mask = jnp.ones((B, S, N), dtype=jnp.float32)
    node_mask = node_mask.at[1, :, N - 37:].set(0.0)   # ragged padding
    node_mask = node_mask.at[0, 2, :].set(0.0)         # fully-padded group (guard path)
    set_weights = 1.0 + 0.1 * jnp.arange(S, dtype=jnp.float32)

    packed = jnp.transpose(coords, (3, 0, 1, 2))       # coords resident in packed layout
    for norm_type in ("length", "gvp", "none"):
        ref = _coord_norm_ref(coords, node_mask, set_weights, norm_type, eps, S)
        out_p = jax.block_until_ready(
            coord_norm_packed(packed, node_mask, set_weights, norm=norm_type, eps=eps))
        out = jnp.transpose(out_p, (1, 2, 3, 0))
        assert out.shape == (B, S, N, 3)
        assert bool(jnp.all(jnp.isfinite(out)))        # fully-padded group -> zeros
        err = float(jnp.max(jnp.abs(out - ref)))
        assert jnp.allclose(out, ref, atol=1e-4, rtol=1e-4), (norm_type, err)

    # PyTorch-layout compatibility wrapper (pays boundary transposes).
    ref_w = _coord_norm_ref(coords, node_mask, set_weights, "length", eps, S)
    out_w = jax.block_until_ready(
        coord_norm(coords, node_mask, set_weights, norm="length", eps=eps))
    assert jnp.allclose(out_w, ref_w, atol=1e-4, rtol=1e-4)

    # ---- Case 2: N not a multiple of 128 -> exercises the lane-padding path ----
    B2, S2, N2 = 2, 3, 50
    k1, _ = jax.random.split(key)
    coords2 = jax.random.normal(k1, (B2, S2, N2, 3), dtype=jnp.float32)
    mask2 = jnp.ones((B2, S2, N2), dtype=jnp.float32).at[0, :, N2 - 11:].set(0.0)
    w2 = jnp.linspace(0.5, 1.5, S2, dtype=jnp.float32)
    ref2 = _coord_norm_ref(coords2, mask2, w2, "length", eps, S2)
    out2 = jax.block_until_ready(coord_norm(coords2, mask2, w2, norm="length", eps=eps))
    assert out2.shape == (B2, S2, N2, 3)
    assert jnp.allclose(out2, ref2, atol=1e-4, rtol=1e-4)

    # ---- Case 3: bf16 coords (dtype preservation + dtype-aware tiling) ----
    coords_bf = coords.astype(jnp.bfloat16)
    ref_bf = _coord_norm_ref(coords_bf.astype(jnp.float32), node_mask, set_weights,
                             "length", eps, S)
    out_bf = jax.block_until_ready(
        coord_norm(coords_bf, node_mask, set_weights, norm="length", eps=eps))
    assert out_bf.dtype == jnp.bfloat16
    assert jnp.allclose(out_bf.astype(jnp.float32), ref_bf, atol=5e-2, rtol=5e-2)

    print("KERNEL_OK")
</pallas_src>

<mosaic_0001>
module attributes {stable_mosaic.version = 11 : i64} {
  func.func @_coord_norm_kernel(%arg0: i32, %arg1: memref<3x8x128xf32, #tpu.memory_space<vmem>>, %arg2: memref<8x128xbf16, #tpu.memory_space<vmem>>, %arg3: memref<8x1xf32, #tpu.memory_space<vmem>>, %arg4: memref<3x8x128xf32, #tpu.memory_space<vmem>>) attributes {dimension_semantics = [#tpu.dimension_semantics<parallel>], iteration_bounds = array<i64: 1>, scalar_prefetch = 0 : i64, scratch_operands = 0 : i64, tpu.core_type = #tpu.core_type<tc>, window_params = [{transform_indices = @transform_0, window_bounds = array<i64: 3, 8, 128>}, {transform_indices = @transform_1, window_bounds = array<i64: 8, 128>}, {transform_indices = @transform_2, window_bounds = array<i64: 8, 1>}, {transform_indices = @transform_3, window_bounds = array<i64: 3, 8, 128>}]} {
    %c0 = arith.constant 0 : index
    %c0_0 = arith.constant 0 : index
    %0 = vector.load %arg2[%c0, %c0_0] : memref<8x128xbf16, #tpu.memory_space<vmem>>, vector<8x128xbf16>
    %1 = arith.extf %0 : vector<8x128xbf16> to vector<8x128xf32>
    %c0_1 = arith.constant 0 : index
    %c0_2 = arith.constant 0 : index
    %2 = vector.load %arg3[%c0_1, %c0_2] : memref<8x1xf32, #tpu.memory_space<vmem>>, vector<8x1xf32>
    %cst = arith.constant dense<0.000000e+00> : vector<8xf32>
    %3 = vector.multi_reduction <add>, %1, %cst [1] : vector<8x128xf32> to vector<8xf32>
    %4 = vector.shape_cast %3 : vector<8xf32> to vector<8x1xf32>
    %cst_3 = arith.constant 1.000000e+00 : f32
    %5 = vector.broadcast %cst_3 : f32 to vector<8x1xf32>
    %6 = arith.maximumf %4, %5 : vector<8x1xf32>
    %cst_4 = arith.constant 1.000000e+00 : f32
    %7 = vector.broadcast %cst_4 : f32 to vector<8x1xf32>
    %8 = arith.divf %7, %6 : vector<8x1xf32>
    %cst_5 = arith.constant 0.000000e+00 : f32
    %9 = vector.broadcast %cst_5 : f32 to vector<8x128xf32>
    %c0_6 = arith.constant 0 : index
    %c0_7 = arith.constant 0 : index
    %c0_8 = arith.constant 0 : index
    %10 = vector.load %arg1[%c0_6, %c0_7, %c0_8] : memref<3x8x128xf32, #tpu.memory_space<vmem>>, vector<1x8x128xf32>
    %11 = vector.shape_cast %10 : vector<1x8x128xf32> to vector<8x128xf32>
    %12 = arith.mulf %11, %1 : vector<8x128xf32>
    %cst_9 = arith.constant dense<0.000000e+00> : vector<8xf32>
    %13 = vector.multi_reduction <add>, %12, %cst_9 [1] : vector<8x128xf32> to vector<8xf32>
    %14 = vector.shape_cast %13 : vector<8xf32> to vector<8x1xf32>
    %15 = arith.mulf %14, %8 : vector<8x1xf32>
    %16 = vector.broadcast %15 : vector<8x1xf32> to vector<8x128xf32>
    %17 = arith.subf %11, %16 : vector<8x128xf32>
    %18 = arith.mulf %17, %1 : vector<8x128xf32>
    %19 = arith.mulf %18, %18 : vector<8x128xf32>
    %20 = arith.addf %9, %19 : vector<8x128xf32>
    %c1 = arith.constant 1 : index
    %c0_10 = arith.constant 0 : index
    %c0_11 = arith.constant 0 : index
    %21 = vector.load %arg1[%c1, %c0_10, %c0_11] : memref<3x8x128xf32, #tpu.memory_space<vmem>>, vector<1x8x128xf32>
    %22 = vector.shape_cast %21 : vector<1x8x128xf32> to vector<8x128xf32>
    %23 = arith.mulf %22, %1 : vector<8x128xf32>
    %cst_12 = arith.constant dense<0.000000e+00> : vector<8xf32>
    %24 = vector.multi_reduction <add>, %23, %cst_12 [1] : vector<8x128xf32> to vector<8xf32>
    %25 = vector.shape_cast %24 : vector<8xf32> to vector<8x1xf32>
    %26 = arith.mulf %25, %8 : vector<8x1xf32>
    %27 = vector.broadcast %26 : vector<8x1xf32> to vector<8x128xf32>
    %28 = arith.subf %22, %27 : vector<8x128xf32>
    %29 = arith.mulf %28, %1 : vector<8x128xf32>
    %30 = arith.mulf %29, %29 : vector<8x128xf32>
    %31 = arith.addf %20, %30 : vector<8x128xf32>
    %c2 = arith.constant 2 : index
    %c0_13 = arith.constant 0 : index
    %c0_14 = arith.constant 0 : index
    %32 = vector.load %arg1[%c2, %c0_13, %c0_14] : memref<3x8x128xf32, #tpu.memory_space<vmem>>, vector<1x8x128xf32>
    %33 = vector.shape_cast %32 : vector<1x8x128xf32> to vector<8x128xf32>
    %34 = arith.mulf %33, %1 : vector<8x128xf32>
    %cst_15 = arith.constant dense<0.000000e+00> : vector<8xf32>
    %35 = vector.multi_reduction <add>, %34, %cst_15 [1] : vector<8x128xf32> to vector<8xf32>
    %36 = vector.shape_cast %35 : vector<8xf32> to vector<8x1xf32>
    %37 = arith.mulf %36, %8 : vector<8x1xf32>
    %38 = vector.broadcast %37 : vector<8x1xf32> to vector<8x128xf32>
    %39 = arith.subf %33, %38 : vector<8x128xf32>
    %40 = arith.mulf %39, %1 : vector<8x128xf32>
    %41 = arith.mulf %40, %40 : vector<8x128xf32>
    %42 = arith.addf %31, %41 : vector<8x128xf32>
    %43 = math.sqrt %42 : vector<8x128xf32>
    %cst_16 = arith.constant dense<0.000000e+00> : vector<8xf32>
    %44 = vector.multi_reduction <add>, %43, %cst_16 [1] : vector<8x128xf32> to vector<8xf32>
    %45 = vector.shape_cast %44 : vector<8xf32> to vector<8x1xf32>
    %46 = arith.mulf %45, %8 : vector<8x1xf32>
    %cst_17 = arith.constant 9.99999997E-7 : f32
    %47 = vector.broadcast %cst_17 : f32 to vector<8x1xf32>
    %48 = arith.addf %46, %47 : vector<8x1xf32>
    %49 = arith.divf %2, %48 : vector<8x1xf32>
    %c0_18 = arith.constant 0 : index
    %c0_19 = arith.constant 0 : index
    %c0_20 = arith.constant 0 : index
    %50 = vector.load %arg1[%c0_18, %c0_19, %c0_20] : memref<3x8x128xf32, #tpu.memory_space<vmem>>, vector<1x8x128xf32>
    %51 = vector.shape_cast %50 : vector<1x8x128xf32> to vector<8x128xf32>
    %52 = vector.broadcast %15 : vector<8x1xf32> to vector<8x128xf32>
    %53 = arith.subf %51, %52 : vector<8x128xf32>
    %54 = arith.mulf %53, %1 : vector<8x128xf32>
    %55 = vector.broadcast %49 : vector<8x1xf32> to vector<8x128xf32>
    %56 = arith.mulf %54, %55 : vector<8x128xf32>
    %c0_21 = arith.constant 0 : index
    %c0_22 = arith.constant 0 : index
    %c0_23 = arith.constant 0 : index
    %57 = vector.load %arg4[%c0_21, %c0_22, %c0_23] : memref<3x8x128xf32, #tpu.memory_space<vmem>>, vector<1x8x128xf32>
    %58 = vector.shape_cast %57 : vector<1x8x128xf32> to vector<8x128xf32>
    %59 = vector.shape_cast %56 : vector<8x128xf32> to vector<1x8x128xf32>
    tpu.vector_store %arg4[%c0_21, %c0_22, %c0_23], %59 {strides = array<i32>} : memref<3x8x128xf32, #tpu.memory_space<vmem>>, vector<1x8x128xf32>,
    %c1_24 = arith.constant 1 : index
    %c0_25 = arith.constant 0 : index
    %c0_26 = arith.constant 0 : index
    %60 = vector.load %arg1[%c1_24, %c0_25, %c0_26] : memref<3x8x128xf32, #tpu.memory_space<vmem>>, vector<1x8x128xf32>
    %61 = vector.shape_cast %60 : vector<1x8x128xf32> to vector<8x128xf32>
    %62 = vector.broadcast %26 : vector<8x1xf32> to vector<8x128xf32>
    %63 = arith.subf %61, %62 : vector<8x128xf32>
    %64 = arith.mulf %63, %1 : vector<8x128xf32>
    %65 = vector.broadcast %49 : vector<8x1xf32> to vector<8x128xf32>
    %66 = arith.mulf %64, %65 : vector<8x128xf32>
    %c1_27 = arith.constant 1 : index
    %c0_28 = arith.constant 0 : index
    %c0_29 = arith.constant 0 : index
    %67 = vector.load %arg4[%c1_27, %c0_28, %c0_29] : memref<3x8x128xf32, #tpu.memory_space<vmem>>, vector<1x8x128xf32>
    %68 = vector.shape_cast %67 : vector<1x8x128xf32> to vector<8x128xf32>
    %69 = vector.shape_cast %66 : vector<8x128xf32> to vector<1x8x128xf32>
    tpu.vector_store %arg4[%c1_27, %c0_28, %c0_29], %69 {strides = array<i32>} : memref<3x8x128xf32, #tpu.memory_space<vmem>>, vector<1x8x128xf32>,
    %c2_30 = arith.constant 2 : index
    %c0_31 = arith.constant 0 : index
    %c0_32 = arith.constant 0 : index
    %70 = vector.load %arg1[%c2_30, %c0_31, %c0_32] : memref<3x8x128xf32, #tpu.memory_space<vmem>>, vector<1x8x128xf32>
    %71 = vector.shape_cast %70 : vector<1x8x128xf32> to vector<8x128xf32>
    %72 = vector.broadcast %37 : vector<8x1xf32> to vector<8x128xf32>
    %73 = arith.subf %71, %72 : vector<8x128xf32>
    %74 = arith.mulf %73, %1 : vector<8x128xf32>
    %75 = vector.broadcast %49 : vector<8x1xf32> to vector<8x128xf32>
    %76 = arith.mulf %74, %75 : vector<8x128xf32>
    %c2_33 = arith.constant 2 : index
    %c0_34 = arith.constant 0 : index
    %c0_35 = arith.constant 0 : index
    %77 = vector.load %arg4[%c2_33, %c0_34, %c0_35] : memref<3x8x128xf32, #tpu.memory_space<vmem>>, vector<1x8x128xf32>
    %78 = vector.shape_cast %77 : vector<1x8x128xf32> to vector<8x128xf32>
    %79 = vector.shape_cast %76 : vector<8x128xf32> to vector<1x8x128xf32>
    tpu.vector_store %arg4[%c2_33, %c0_34, %c0_35], %79 {strides = array<i32>} : memref<3x8x128xf32, #tpu.memory_space<vmem>>, vector<1x8x128xf32>,
    return
  }
  func.func @transform_0(%arg0: i32) -> (i32, i32, i32) {
    %c0_i32 = arith.constant 0 : i32
    %c0_i32_0 = arith.constant 0 : i32
    %c0_i32_1 = arith.constant 0 : i32
    return %c0_i32, %arg0, %c0_i32_0 : i32, i32, i32
  }
  func.func @transform_1(%arg0: i32) -> (i32, i32) {
    %c0_i32 = arith.constant 0 : i32
    %c0_i32_0 = arith.constant 0 : i32
    return %arg0, %c0_i32 : i32, i32
  }
  func.func @transform_2(%arg0: i32) -> (i32, i32) {
    %c0_i32 = arith.constant 0 : i32
    %c0_i32_0 = arith.constant 0 : i32
    return %arg0, %c0_i32 : i32, i32
  }
  func.func @transform_3(%arg0: i32) -> (i32, i32, i32) {
    %c0_i32 = arith.constant 0 : i32
    %c0_i32_0 = arith.constant 0 : i32
    %c0_i32_1 = arith.constant 0 : i32
    return %c0_i32, %arg0, %c0_i32_0 : i32, i32, i32
  }
}

</mosaic_0001>

<llo_original>
// kernel: tpu_custom_call.1
$region0: #{tpu_custom_call.1}
  #allocation0 [shape = 'u32[]', space=smem, size = 0x4, offset = 0x4, fixed_abs, tag = 'smem constant byte address 0x4 - core index']
  #allocation1 [shape = 'u32[144,128]{1,0:T(1,128)}', space=vmem, size = 0x12000, scoped, tag = 'internal scratch']
  %s0 = inlined_call_operand.hbm [shape: f32[3,8,128], index: 0, kind: input, shape index: {}]
  %s1 = inlined_call_operand.vmem [shape: bf16[8,128], index: 1, kind: input, shape index: {}]
  %s2 = inlined_call_operand.vmem [shape: f32[8,1], index: 2, kind: input, shape index: {}]
  %s3 = inlined_call_operand.hbm [shape: f32[3,8,128], index: 3, kind: output, shape index: {}]
  %s4 = sld [smem:[#allocation0]]
  $region26: #{tpu_custom_call.1} parent=0
    _
  %s6 = ssub.s32 1, %s4
  %s7 = scalar_select 0, %s6, %s4
  $region1: #{tpu_custom_call.1} parent=0
    #allocation2 [shape = 'u8[12288]{0}', space=vmem, size = 0x3000, scoped, tag = 'input window, operand 0, single buffered']
    #allocation3 [shape = 's32[1]{0}', space=sflag, size = 0x4, scoped, tag = 'scoped memory for tpu_custom_call.1']
    #allocation4 [shape = 's32[1]{0}', space=sflag, size = 0x4, scoped, tag = 'scoped memory for tpu_custom_call.1']
    #allocation5 [shape = 'u8[12288]{0}', space=vmem, size = 0x3000, scoped, tag = 'output window, operand 0, single buffered']
    %8 = vsyncpa [#allocation3], 0
    %9 = vsyncpa [#allocation4], 0
    // Predicated region
    $region2: #{tpu_custom_call.1} parent=1 // pred_check
      _
    $region3: #{tpu_custom_call.1} parent=1 // pred_check_branch
      %11 = sbr.rel (0) target = $region5
    $region4: #{tpu_custom_call.1} parent=1 // pred_region
      %s13 = ssub.s32 384, 384
      %14 = vsyncadd [#allocation3], %s13
      %s15 = sshll.u32 [#allocation2], 4
      %s16 = int_to_ptr.vmem [resolvable:$true] %s15
      %21 = dma.hbm_to_vmem [thread:$0]  %s0, 384, %s16, [#allocation3], 128, 128, 8
    $region5: #{tpu_custom_call.1} parent=1 // pred_fallthru
      _
    // Predicated region
    $region6: #{tpu_custom_call.1} parent=1 // pred_check
      _
    $region7: #{tpu_custom_call.1} parent=1 // pred_check_branch
      %23 = sbr.rel (0) target = $region9
    $region8: #{tpu_custom_call.1} parent=1 // pred_region
      _
    $region9: #{tpu_custom_call.1} parent=1 // pred_fallthru
      _
    // Predicated region
    $region10: #{tpu_custom_call.1} parent=1 // pred_check
      _
    $region11: #{tpu_custom_call.1} parent=1 // pred_check_branch
      %25 = sbr.rel (0) target = $region13
    $region12: #{tpu_custom_call.1} parent=1 // pred_region
      _
    $region13: #{tpu_custom_call.1} parent=1 // pred_fallthru
      _
    // Predicated region
    $region14: #{tpu_custom_call.1} parent=1 // pred_check
      _
    $region15: #{tpu_custom_call.1} parent=1 // pred_check_branch
      %27 = sbr.rel (0) target = $region17
    $region16: #{tpu_custom_call.1} parent=1 // pred_region
      %28 = dma.done [#allocation3], 384
    $region17: #{tpu_custom_call.1} parent=1 // pred_fallthru
      _
    %v29 = vld [vmem:[%s1] sm:$0xf]
    %v30 = vunpack.c.l.bf16 %v29
    %v31 = vld [vmem:[%s2] sm:$0xff]
    %32 = vadd.xlane.f32.xlu0 %v30
    %v33 = vpop.xlane.xlu0 %32
    %v34 = vmax.f32 %v33, 1.0
    %v35 = vrcp.pop %v34
    %v36 = vmul.f32 1.0, %v35
    %v37 = vld [vmem:[#allocation2] sm:$0xff]
    %v38 = vmul.f32 %v37, %v30
    %39 = vadd.xlane.f32.xlu0 %v38
    %v40 = vpop.xlane.xlu0 %39
    %v41 = vmul.f32 %v40, %v36
    %v42 = vsub.f32 %v37, %v41
    %v43 = vmul.f32 %v42, %v30
    %v44 = vmul.f32 %v43, %v43
    %v45 = vadd.f32 %v44, 0.0
    %s46 = scalar_lea.vmem [#allocation2], 8
    %v47 = vld [vmem:[%s46] sm:$0xff]
    %v48 = vmul.f32 %v47, %v30
    %49 = vadd.xlane.f32.xlu0 %v48
    %v50 = vpop.xlane.xlu0 %49
    %v51 = vmul.f32 %v50, %v36
    %v52 = vsub.f32 %v47, %v51
    %v53 = vmul.f32 %v52, %v30
    %v54 = vmul.f32 %v53, %v53
    %v55 = vadd.f32 %v45, %v54
    %s56 = scalar_lea.vmem [#allocation2], 16
    %v57 = vld [vmem:[%s56] sm:$0xff]
    %v58 = vmul.f32 %v57, %v30
    %59 = vadd.xlane.f32.xlu0 %v58
    %v60 = vpop.xlane.xlu0 %59
    %v61 = vmul.f32 %v60, %v36
    %v62 = vsub.f32 %v57, %v61
    %v63 = vmul.f32 %v62, %v30
    %v64 = vmul.f32 %v63, %v63
    %v65 = vadd.f32 %v55, %v64
    %v66 = vrsqrt.pop %v65
    %v67 = vmul.f32 %v65, %v66
    %vm68 = vcmp.eq.f32.partialorder %v65, inf
    %v69 = vsel %vm68, %v65, %v67
    %vm70 = vcmp.eq.f32.partialorder %v65, 0.0
    %v71 = vand.u32 %v65, 2147483648
    %v72 = vsel %vm70, %v71, %v69
    %73 = vadd.xlane.f32.xlu0 %v72
    %v74 = vpop.xlane.xlu0 %73
    %v75 = vmul.f32 %v74, %v36
    %v76 = vadd.f32 %v75, 1e-06
    %v77 = vrcp.pop %v76
    %v78 = vmul.f32 %v31, %v77
    %80 = vset.pattern.permute.xlu0 0
    %81 = vperm.xlu0 %80, %v78
    %v82 = vpop.permute.xlu0 %81
    %v84 = vmul.f32 %v43, %v82
    %85 = vst [vmem:[#allocation5] sm:$0xff] %v84
    %v86 = vld [vmem:[%s46] sm:$0xff]
    %v87 = vsub.f32 %v86, %v51
    %v88 = vmul.f32 %v87, %v30
    %v89 = vmul.f32 %v88, %v82
    %s90 = scalar_lea.vmem [#allocation5], 8
    %91 = vst [vmem:[%s90] sm:$0xff] %v89
    %v92 = vld [vmem:[%s56] sm:$0xff]
    %v93 = vsub.f32 %v92, %v61
    %v94 = vmul.f32 %v93, %v30
    %v95 = vmul.f32 %v94, %v82
    %s96 = scalar_lea.vmem [#allocation5], 16
    %97 = vst [vmem:[%s96] sm:$0xff] %v95
    // Predicated region
    $region18: #{tpu_custom_call.1} parent=1 // pred_check
      _
    $region19: #{tpu_custom_call.1} parent=1 // pred_check_branch
      %99 = sbr.rel (0) target = $region21
    $region20: #{tpu_custom_call.1} parent=1 // pred_region
      %s101 = ssub.s32 384, 384
      %102 = vsyncadd [#allocation4], %s101
      %s103 = sshll.u32 [#allocation5], 4
      %s104 = int_to_ptr.vmem [resolvable:$true] %s103
      %109 = dma.vmem_to_hbm [thread:$0]  %s104, 384, %s3, [#allocation4], 128, 128, 8
    $region21: #{tpu_custom_call.1} parent=1 // pred_fallthru
      _
    // Predicated region
    $region22: #{tpu_custom_call.1} parent=1 // pred_check
      _
    $region23: #{tpu_custom_call.1} parent=1 // pred_check_branch
      %111 = sbr.rel (0) target = $region25
    $region24: #{tpu_custom_call.1} parent=1 // pred_region
      %112 = dma.done [#allocation4], 384
    $region25: #{tpu_custom_call.1} parent=1 // pred_fallthru
      _
    %113 = vsyncpa [#allocation3], 1
    %114 = vsyncpa [#allocation4], 1

</llo_original>
